<compile_context>
chip_gen: v7x
topology: tpu7x:2x2x1
jax: 0.10.0
libtpu: 0.0.40
codegen_flags: <defaults>
</compile_context>

<pallas_src>
import functools

import jax
import jax.numpy as jnp
from jax import lax
from jax.experimental import pallas as pl
from jax.experimental.pallas import tpu as pltpu


# ----------------------------------------------------------------------------- #
# Pass 1: ray / axis-aligned box intersection (slab method), tiled over rays.
# ----------------------------------------------------------------------------- #
def _ray_box_kernel(ro_ref, rd_ref, ts_ref, te_ref, *, bbox_length: float):
    # ro_ref, rd_ref : (3, M_TILE) f32     ts_ref, te_ref : (1, M_TILE) f32
    half = float(bbox_length) / 2.0
    ro = ro_ref[...]
    rd = rd_ref[...]

    invdir = 1.0 / rd                   # (3, MT)
    neg = invdir < 0.0
    b_lo = jnp.where(neg, half, -half)  # bounds[sign]
    b_hi = jnp.where(neg, -half, half)  # bounds[1 - sign]
    t_lo = (b_lo - ro) * invdir         # per-axis entry t
    t_hi = (b_hi - ro) * invdir         # per-axis exit t

    tmin, tmax = t_lo[0:1, :], t_hi[0:1, :]
    tymin, tymax = t_lo[1:2, :], t_hi[1:2, :]
    valid = jnp.logical_not(jnp.logical_or(tmin > tymax, tymin > tmax))
    tmin = jnp.maximum(tmin, tymin)
    tmax = jnp.minimum(tmax, tymax)

    tzmin, tzmax = t_lo[2:3, :], t_hi[2:3, :]
    valid = jnp.logical_and(
        valid, jnp.logical_not(jnp.logical_or(tmin > tzmax, tzmin > tmax)))
    tmin = jnp.maximum(tmin, tzmin)
    tmax = jnp.minimum(tmax, tzmax)

    ts_ref[...] = jnp.where(valid, tmin, -1.0)
    te_ref[...] = jnp.where(valid, tmax, -2.0)


# ----------------------------------------------------------------------------- #
# Pass 2: stratified depth sampling + points, tiled over rays.
# Output is component-major (3, N, M_TILE): N on the sublane axis -> dense stores.
# ----------------------------------------------------------------------------- #
def _sample_points_kernel(ts_ref, te_ref, ro_ref, rd_ref, u_ref, out_ref, *,
                          num_samples: int):
    n = num_samples
    inv_nm1 = 1.0 / float(n - 1)

    t_start = ts_ref[...]                       # (1, MT)
    span = te_ref[...] - t_start                # (1, MT)

    steps = lax.broadcasted_iota(jnp.float32, (n, 1), 0) * inv_nm1      # (n, 1)
    depths = t_start + steps * span + u_ref[...] * (span * inv_nm1)     # (n, MT)

    # unrolled over the 3 components so every store is a dense (n, MT) tile
    for c in range(3):
        out_ref[c, :, :] = ro_ref[c:c + 1, :] + rd_ref[c:c + 1, :] * depths


# ----------------------------------------------------------------------------- #
# Wrapper
# ----------------------------------------------------------------------------- #
def _round_up(x: int, n: int) -> int:
    return ((x + n - 1) // n) * n


def _choose_m_tile(num_samples: int) -> int:
    # Per-lane bytes (double-buffered): output (3N) + jitter (N) + ro/rd/ts/te (8) f32.
    per_lane_bytes = (4 * num_samples + 8) * 4 * 2
    budget = 6 * 1024 * 1024          # comfortably under the 16 MiB v5e default scoped VMEM
    mt = budget // per_lane_bytes
    mt = max(128, (mt // 128) * 128)
    return int(min(mt, 2048))


def ray_sampler(ray_origins, ray_directions, *, num_samples,
                bbox_length=1.0, seed=0, m_tile=None):
    """JAX wrapper: accepts (..., 3) rays, returns (num_samples, ..., 3)."""
    orig_shape = tuple(ray_origins.shape)
    assert orig_shape[-1] == 3
    assert num_samples >= 2, "num_samples_per_ray must be >= 2 (matches torch N-1 division)"
    n = int(num_samples)

    m = 1
    for d in orig_shape[:-1]:
        m *= int(d)

    # component-major (3, M): flattened ray index on the 128-wide lane axis
    ro = jnp.transpose(ray_origins.reshape(m, 3).astype(jnp.float32))    # (3, M)
    rd = jnp.transpose(ray_directions.reshape(m, 3).astype(jnp.float32))

    # ---- tile / pad the ray axis -------------------------------------------
    if m_tile is None:
        m_tile = _choose_m_tile(n)
    mp128 = _round_up(m, 128)
    m_tile = min(int(m_tile), mp128)
    grid_m = pl.cdiv(mp128, m_tile)
    mp = grid_m * m_tile
    pad = mp - m

    ro_p = jnp.pad(ro, ((0, 0), (0, pad)))
    rd_p = jnp.pad(rd, ((0, 0), (0, pad)), constant_values=1.0)  # no 0-dirs in padding

    # ---- pass 1: per-ray box limits (Pallas, tiled) -------------------------
    ts_raw, te_raw = pl.pallas_call(
        functools.partial(_ray_box_kernel, bbox_length=float(bbox_length)),
        grid=(grid_m,),
        in_specs=[pl.BlockSpec((3, m_tile), lambda i: (0, i)),
                  pl.BlockSpec((3, m_tile), lambda i: (0, i))],
        out_specs=[pl.BlockSpec((1, m_tile), lambda i: (0, i)),
                   pl.BlockSpec((1, m_tile), lambda i: (0, i))],
        out_shape=[jax.ShapeDtypeStruct((1, mp), jnp.float32),
                   jax.ShapeDtypeStruct((1, mp), jnp.float32)],
        compiler_params=pltpu.CompilerParams(dimension_semantics=("parallel",)),
    )(ro_p, rd_p)

    # ---- global invalid-ray fixup (must be a GLOBAL reduction; tiny, plain JAX)
    ts = ts_raw[0, :m]
    te = te_raw[0, :m]
    valid = te > ts
    any_valid = jnp.any(valid)
    big = jnp.float32(3.0e38)
    vmin = jnp.min(jnp.where(valid, ts, big))
    vmax = jnp.max(jnp.where(valid, ts, -big))       # max over t_start, as in the torch code
    ts_fix = jnp.where(valid, ts, jnp.where(any_valid, vmin, ts))
    te_fix = jnp.where(valid, te, jnp.where(any_valid, vmax, te))
    ts_p = jnp.pad(ts_fix, (0, pad))[None, :]        # (1, Mp)
    te_p = jnp.pad(te_fix, (0, pad))[None, :]        # (1, Mp)

    # ---- stratified jitter (host-side RNG -> tile-size independent) ---------
    u = jax.random.uniform(jax.random.PRNGKey(seed), (n, mp), dtype=jnp.float32)

    # ---- pass 2: depths + points (Pallas, tiled, dense (3, N, MT) stores) ----
    pts = pl.pallas_call(
        functools.partial(_sample_points_kernel, num_samples=n),
        grid=(grid_m,),
        in_specs=[pl.BlockSpec((1, m_tile), lambda i: (0, i)),      # t_start
                  pl.BlockSpec((1, m_tile), lambda i: (0, i)),      # t_end
                  pl.BlockSpec((3, m_tile), lambda i: (0, i)),      # ray origins
                  pl.BlockSpec((3, m_tile), lambda i: (0, i)),      # ray directions
                  pl.BlockSpec((n, m_tile), lambda i: (0, i))],     # jitter
        out_specs=pl.BlockSpec((3, n, m_tile), lambda i: (0, 0, i)),
        out_shape=jax.ShapeDtypeStruct((3, n, mp), jnp.float32),
        compiler_params=pltpu.CompilerParams(dimension_semantics=("parallel",)),
    )(ts_p, te_p, ro_p, rd_p, u)                                    # (3, N, Mp)

    # Back to the PyTorch convention (N, *batch, 3).  (Full HBM round trip; keep the
    # (3, N, M) layout downstream if the consumer allows it.)
    out = jnp.transpose(pts, (1, 2, 0))[:, :m, :]                   # (N, M, 3)
    return out.reshape((n,) + orig_shape)


if __name__ == "__main__":
    key = jax.random.PRNGKey(0)
    k1, k2 = jax.random.split(key)

    B, R, N = 2, 64, 8                    # 2 batches x 64 rays, 8 samples per ray
    ray_origins = 0.3 * jax.random.normal(k1, (B, R, 3), dtype=jnp.float32)
    dirs = jax.random.normal(k2, (B, R, 3), dtype=jnp.float32)
    ray_directions = dirs / jnp.linalg.norm(dirs, axis=-1, keepdims=True)

    pts = ray_sampler(ray_origins, ray_directions,
                      num_samples=N, bbox_length=1.0, seed=0)
    pts = jax.block_until_ready(pts)

    assert pts.shape == (N, B, R, 3), pts.shape
    assert bool(jnp.isfinite(pts).all())
    print("KERNEL_OK")
</pallas_src>

<mosaic_0001>
module attributes {stable_mosaic.version = 11 : i64} {
  func.func @_ray_box_kernel(%arg0: i32, %arg1: memref<3x128xf32, #tpu.memory_space<vmem>>, %arg2: memref<3x128xf32, #tpu.memory_space<vmem>>, %arg3: memref<1x128xf32, #tpu.memory_space<vmem>>, %arg4: memref<1x128xf32, #tpu.memory_space<vmem>>) attributes {dimension_semantics = [#tpu.dimension_semantics<parallel>], iteration_bounds = array<i64: 1>, scalar_prefetch = 0 : i64, scratch_operands = 0 : i64, tpu.core_type = #tpu.core_type<tc>, window_params = [{transform_indices = @transform_0, window_bounds = array<i64: 3, 128>}, {transform_indices = @transform_1, window_bounds = array<i64: 3, 128>}, {transform_indices = @transform_2, window_bounds = array<i64: 1, 128>}, {transform_indices = @transform_3, window_bounds = array<i64: 1, 128>}]} {
    %c0 = arith.constant 0 : index
    %c0_0 = arith.constant 0 : index
    %0 = vector.load %arg1[%c0, %c0_0] : memref<3x128xf32, #tpu.memory_space<vmem>>, vector<3x128xf32>
    %c0_1 = arith.constant 0 : index
    %c0_2 = arith.constant 0 : index
    %1 = vector.load %arg2[%c0_1, %c0_2] : memref<3x128xf32, #tpu.memory_space<vmem>>, vector<3x128xf32>
    %cst = arith.constant 1.000000e+00 : f32
    %2 = vector.broadcast %cst : f32 to vector<3x128xf32>
    %3 = arith.divf %2, %1 : vector<3x128xf32>
    %cst_3 = arith.constant 0.000000e+00 : f32
    %4 = vector.broadcast %cst_3 : f32 to vector<3x128xf32>
    %5 = arith.cmpf olt, %3, %4 : vector<3x128xf32>
    %cst_4 = arith.constant 5.000000e-01 : f32
    %cst_5 = arith.constant -5.000000e-01 : f32
    %6 = vector.broadcast %cst_4 : f32 to vector<3x128xf32>
    %7 = vector.broadcast %cst_5 : f32 to vector<3x128xf32>
    %8 = arith.select %5, %6, %7 : vector<3x128xi1>, vector<3x128xf32>
    %cst_6 = arith.constant -5.000000e-01 : f32
    %cst_7 = arith.constant 5.000000e-01 : f32
    %9 = vector.broadcast %cst_6 : f32 to vector<3x128xf32>
    %10 = vector.broadcast %cst_7 : f32 to vector<3x128xf32>
    %11 = arith.select %5, %9, %10 : vector<3x128xi1>, vector<3x128xf32>
    %12 = arith.subf %8, %0 : vector<3x128xf32>
    %13 = arith.mulf %12, %3 : vector<3x128xf32>
    %14 = arith.subf %11, %0 : vector<3x128xf32>
    %15 = arith.mulf %14, %3 : vector<3x128xf32>
    %16 = vector.extract_strided_slice %13 {offsets = [0, 0], sizes = [1, 128], strides = [1, 1]} : vector<3x128xf32> to vector<1x128xf32>
    %17 = vector.extract_strided_slice %15 {offsets = [0, 0], sizes = [1, 128], strides = [1, 1]} : vector<3x128xf32> to vector<1x128xf32>
    %18 = vector.extract_strided_slice %13 {offsets = [1, 0], sizes = [1, 128], strides = [1, 1]} : vector<3x128xf32> to vector<1x128xf32>
    %19 = vector.extract_strided_slice %15 {offsets = [1, 0], sizes = [1, 128], strides = [1, 1]} : vector<3x128xf32> to vector<1x128xf32>
    %20 = arith.cmpf ogt, %16, %19 : vector<1x128xf32>
    %21 = arith.cmpf ogt, %18, %17 : vector<1x128xf32>
    %22 = arith.ori %20, %21 : vector<1x128xi1>
    %cst_8 = arith.constant dense<true> : vector<1x128xi1>
    %23 = arith.xori %22, %cst_8 : vector<1x128xi1>
    %24 = arith.maximumf %16, %18 : vector<1x128xf32>
    %25 = arith.minimumf %17, %19 : vector<1x128xf32>
    %26 = vector.extract_strided_slice %13 {offsets = [2, 0], sizes = [1, 128], strides = [1, 1]} : vector<3x128xf32> to vector<1x128xf32>
    %27 = vector.extract_strided_slice %15 {offsets = [2, 0], sizes = [1, 128], strides = [1, 1]} : vector<3x128xf32> to vector<1x128xf32>
    %28 = arith.cmpf ogt, %24, %27 : vector<1x128xf32>
    %29 = arith.cmpf ogt, %26, %25 : vector<1x128xf32>
    %30 = arith.ori %28, %29 : vector<1x128xi1>
    %cst_9 = arith.constant dense<true> : vector<1x128xi1>
    %31 = arith.xori %30, %cst_9 : vector<1x128xi1>
    %32 = arith.andi %23, %31 : vector<1x128xi1>
    %33 = arith.maximumf %24, %26 : vector<1x128xf32>
    %34 = arith.minimumf %25, %27 : vector<1x128xf32>
    %cst_10 = arith.constant -1.000000e+00 : f32
    %35 = vector.broadcast %cst_10 : f32 to vector<1x128xf32>
    %36 = arith.select %32, %33, %35 : vector<1x128xi1>, vector<1x128xf32>
    %c0_11 = arith.constant 0 : index
    %c0_12 = arith.constant 0 : index
    %37 = vector.load %arg3[%c0_11, %c0_12] : memref<1x128xf32, #tpu.memory_space<vmem>>, vector<1x128xf32>
    tpu.vector_store %arg3[%c0_11, %c0_12], %36 {strides = array<i32>} : memref<1x128xf32, #tpu.memory_space<vmem>>, vector<1x128xf32>,
    %cst_13 = arith.constant -2.000000e+00 : f32
    %38 = vector.broadcast %cst_13 : f32 to vector<1x128xf32>
    %39 = arith.select %32, %34, %38 : vector<1x128xi1>, vector<1x128xf32>
    %c0_14 = arith.constant 0 : index
    %c0_15 = arith.constant 0 : index
    %40 = vector.load %arg4[%c0_14, %c0_15] : memref<1x128xf32, #tpu.memory_space<vmem>>, vector<1x128xf32>
    tpu.vector_store %arg4[%c0_14, %c0_15], %39 {strides = array<i32>} : memref<1x128xf32, #tpu.memory_space<vmem>>, vector<1x128xf32>,
    return
  }
  func.func @transform_0(%arg0: i32) -> (i32, i32) {
    %c0_i32 = arith.constant 0 : i32
    %c0_i32_0 = arith.constant 0 : i32
    return %c0_i32, %arg0 : i32, i32
  }
  func.func @transform_1(%arg0: i32) -> (i32, i32) {
    %c0_i32 = arith.constant 0 : i32
    %c0_i32_0 = arith.constant 0 : i32
    return %c0_i32, %arg0 : i32, i32
  }
  func.func @transform_2(%arg0: i32) -> (i32, i32) {
    %c0_i32 = arith.constant 0 : i32
    %c0_i32_0 = arith.constant 0 : i32
    return %c0_i32, %arg0 : i32, i32
  }
  func.func @transform_3(%arg0: i32) -> (i32, i32) {
    %c0_i32 = arith.constant 0 : i32
    %c0_i32_0 = arith.constant 0 : i32
    return %c0_i32, %arg0 : i32, i32
  }
}

</mosaic_0001>

<llo_original>
// kernel: tpu_custom_call.1
$region0: #{tpu_custom_call.1}
  #allocation0 [shape = 'u32[]', space=smem, size = 0x4, offset = 0x4, fixed_abs, tag = 'smem constant byte address 0x4 - core index']
  #allocation1 [shape = 'u32[144,128]{1,0:T(1,128)}', space=vmem, size = 0x12000, scoped, tag = 'internal scratch']
  %s0 = inlined_call_operand.hbm [shape: f32[3,128], index: 0, kind: input, shape index: {}]
  %s1 = inlined_call_operand.hbm [shape: f32[3,128], index: 1, kind: input, shape index: {}]
  %s2 = inlined_call_operand.hbm [shape: f32[1,128], index: 2, kind: output, shape index: {0}]
  %s3 = inlined_call_operand.hbm [shape: f32[1,128], index: 3, kind: output, shape index: {1}]
  %4 = xla_tuple %s2, %s3
  %s5 = sld [smem:[#allocation0]]
  $region34: #{tpu_custom_call.1} parent=0
    _
  %s7 = ssub.s32 1, %s5
  %s8 = scalar_select 0, %s7, %s5
  $region1: #{tpu_custom_call.1} parent=0
    #allocation2 [shape = 'u8[2048]{0}', space=vmem, size = 0x800, scoped, tag = 'input window, operand 0, single buffered']
    #allocation3 [shape = 's32[1]{0}', space=sflag, size = 0x4, scoped, tag = 'scoped memory for tpu_custom_call.1']
    #allocation4 [shape = 's32[1]{0}', space=sflag, size = 0x4, scoped, tag = 'scoped memory for tpu_custom_call.1']
    #allocation5 [shape = 'u8[2048]{0}', space=vmem, size = 0x800, scoped, tag = 'input window, operand 1, single buffered']
    #allocation6 [shape = 's32[1]{0}', space=sflag, size = 0x4, scoped, tag = 'scoped memory for tpu_custom_call.1']
    #allocation7 [shape = 'u8[512]{0}', space=vmem, size = 0x400, scoped, tag = 'output window, operand 0, single buffered']
    #allocation8 [shape = 'u8[512]{0}', space=vmem, size = 0x400, scoped, tag = 'output window, operand 1, single buffered']
    #allocation9 [shape = 's32[1]{0}', space=sflag, size = 0x4, scoped, tag = 'scoped memory for tpu_custom_call.1']
    %9 = vsyncpa [#allocation3], 0
    %10 = vsyncpa [#allocation6], 0
    %11 = vsyncpa [#allocation4], 0
    %12 = vsyncpa [#allocation9], 0
    // Predicated region
    $region2: #{tpu_custom_call.1} parent=1 // pred_check
      _
    $region3: #{tpu_custom_call.1} parent=1 // pred_check_branch
      %14 = sbr.rel (0) target = $region5
    $region4: #{tpu_custom_call.1} parent=1 // pred_region
      %s16 = ssub.s32 64, 64
      %17 = vsyncadd [#allocation3], %s16
      %s19 = sshll.u32 [#allocation2], 4
      %s20 = int_to_ptr.vmem [resolvable:$true] %s19
      %22 = dma.hbm_to_vmem [thread:$0]  %s0, 64, %s20, [#allocation3]
    $region5: #{tpu_custom_call.1} parent=1 // pred_fallthru
      _
    // Predicated region
    $region6: #{tpu_custom_call.1} parent=1 // pred_check
      _
    $region7: #{tpu_custom_call.1} parent=1 // pred_check_branch
      %24 = sbr.rel (0) target = $region9
    $region8: #{tpu_custom_call.1} parent=1 // pred_region
      %s26 = ssub.s32 64, 64
      %27 = vsyncadd [#allocation6], %s26
      %s29 = sshll.u32 [#allocation5], 4
      %s30 = int_to_ptr.vmem [resolvable:$true] %s29
      %32 = dma.hbm_to_vmem [thread:$0]  %s1, 64, %s30, [#allocation6]
    $region9: #{tpu_custom_call.1} parent=1 // pred_fallthru
      _
    // Predicated region
    $region10: #{tpu_custom_call.1} parent=1 // pred_check
      _
    $region11: #{tpu_custom_call.1} parent=1 // pred_check_branch
      %34 = sbr.rel (0) target = $region13
    $region12: #{tpu_custom_call.1} parent=1 // pred_region
      %35 = dma.done [#allocation3], 64
    $region13: #{tpu_custom_call.1} parent=1 // pred_fallthru
      _
    // Predicated region
    $region14: #{tpu_custom_call.1} parent=1 // pred_check
      _
    $region15: #{tpu_custom_call.1} parent=1 // pred_check_branch
      %37 = sbr.rel (0) target = $region17
    $region16: #{tpu_custom_call.1} parent=1 // pred_region
      %38 = dma.done [#allocation6], 64
    $region17: #{tpu_custom_call.1} parent=1 // pred_fallthru
      _
    %v39 = vld [vmem:[#allocation2] sm:$0x7]
    %v40 = vld [vmem:[#allocation5] sm:$0x7]
    %v41 = vrcp.pop %v40
    %v42 = vmul.f32 1.0, %v41
    %vm43 = vcmp.lt.f32.partialorder %v42, 0.0
    %v44 = vsel %vm43, 0.5, -0.5
    %v45 = vsel %vm43, -0.5, 0.5
    %v46 = vsub.f32 %v44, %v39
    %v47 = vmul.f32 %v46, %v42
    %v48 = vsub.f32 %v45, %v39
    %v49 = vmul.f32 %v48, %v42
    %v51 = vrot.slane %v49, 1
    %vm53 = vcmp.gt.f32.partialorder %v47, %v51
    %v54 = vrot.slane %v49, 7
    %vm56 = vcmp.gt.f32.partialorder %v47, %v54
    %v57 = vsel %vm56, 1, 0
    %v58 = vrot.slane %v57, 1
    %vm59 = vcmp.ne.s32.totalorder %v58, 0
    %vm60 = vmor %vm53, %vm59
    %vm61 = vmxor %vm60, 1
    %v63 = vrot.slane %v47, 1
    %v65 = vmax.f32 %v47, %v63
    %v66 = vmin.f32 %v49, %v51
    %v67 = vrot.slane %v49, 2
    %vm69 = vcmp.gt.f32.partialorder %v65, %v67
    %v71 = vrot.slane %v66, 6
    %vm73 = vcmp.gt.f32.partialorder %v47, %v71
    %v74 = vsel %vm73, 1, 0
    %v75 = vrot.slane %v74, 2
    %vm76 = vcmp.ne.s32.totalorder %v75, 0
    %vm77 = vmor %vm69, %vm76
    %vm78 = vmxor %vm77, 1
    %vm79 = vmand %vm61, %vm78
    %v80 = vrot.slane %v47, 2
    %v82 = vmax.f32 %v65, %v80
    %v83 = vmin.f32 %v66, %v67
    %v84 = vsel %vm79, %v82, -1.0
    %85 = vst [vmem:[#allocation7] sm:$0x1] %v84
    %v86 = vsel %vm79, %v83, -2.0
    %87 = vst [vmem:[#allocation8] sm:$0x1] %v86
    // Predicated region
    $region18: #{tpu_custom_call.1} parent=1 // pred_check
      _
    $region19: #{tpu_custom_call.1} parent=1 // pred_check_branch
      %89 = sbr.rel (0) target = $region21
    $region20: #{tpu_custom_call.1} parent=1 // pred_region
      %s91 = ssub.s32 16, 16
      %92 = vsyncadd [#allocation4], %s91
      %s94 = sshll.u32 [#allocation7], 4
      %s95 = int_to_ptr.vmem [resolvable:$true] %s94
      %97 = dma.vmem_to_hbm [thread:$0]  %s95, 16, %s2, [#allocation4]
    $region21: #{tpu_custom_call.1} parent=1 // pred_fallthru
      _
    // Predicated region
    $region22: #{tpu_custom_call.1} parent=1 // pred_check
      _
    $region23: #{tpu_custom_call.1} parent=1 // pred_check_branch
      %99 = sbr.rel (0) target = $region25
    $region24: #{tpu_custom_call.1} parent=1 // pred_region
      %s101 = ssub.s32 16, 16
      %102 = vsyncadd [#allocation9], %s101
      %s104 = sshll.u32 [#allocation8], 4
      %s105 = int_to_ptr.vmem [resolvable:$true] %s104
      %107 = dma.vmem_to_hbm [thread:$0]  %s105, 16, %s3, [#allocation9]
    $region25: #{tpu_custom_call.1} parent=1 // pred_fallthru
      _
    // Predicated region
    $region26: #{tpu_custom_call.1} parent=1 // pred_check
      _
    $region27: #{tpu_custom_call.1} parent=1 // pred_check_branch
      %109 = sbr.rel (0) target = $region29
    $region28: #{tpu_custom_call.1} parent=1 // pred_region
      %110 = dma.done [#allocation4], 16
    $region29: #{tpu_custom_call.1} parent=1 // pred_fallthru
      _
    // Predicated region
    $region30: #{tpu_custom_call.1} parent=1 // pred_check
      _
    $region31: #{tpu_custom_call.1} parent=1 // pred_check_branch
      %112 = sbr.rel (0) target = $region33
    $region32: #{tpu_custom_call.1} parent=1 // pred_region
      %113 = dma.done [#allocation9], 16
    $region33: #{tpu_custom_call.1} parent=1 // pred_fallthru
      _
    %114 = vsyncpa [#allocation3], 1
    %115 = vsyncpa [#allocation6], 1
    %116 = vsyncpa [#allocation4], 1
    %117 = vsyncpa [#allocation9], 1

</llo_original>
